<compile_context>
chip_gen: v5e
topology: v5e:2x2
jax: 0.10.0
libtpu: 0.0.40
codegen_flags: <defaults>
</compile_context>

<pallas_src>
import jax
import jax.numpy as jnp
from jax import lax
from jax.experimental import pallas as pl
from jax.experimental.pallas import tpu as pltpu

LN_EPS = 1e-5  # torch.nn.LayerNorm default


def _round_up(a, b):
    return ((a + b - 1) // b) * b


def _logits_post_kernel(x_ref, wt_ref, g_ref, b_ref, o_ref):
    # x_ref:  (tm, D)  rows of decoder output (f32)
    # wt_ref: (D, tn)  pre-transposed, tile-contiguous bf16 embedding block
    # g_ref, b_ref: (1, D) LayerNorm scale / bias (f32)
    # o_ref:  (tm, tn) logits tile (f32)
    #
    # LayerNorm is recomputed per tile: it is <1% of the (tm,D)x(D,tn) matmul
    # FLOPs, x is already VMEM-resident, and it keeps every grid point
    # independent so both grid axes can be megacore-parallel.
    x = x_ref[...].astype(jnp.float32)
    mean = jnp.mean(x, axis=-1, keepdims=True)
    centered = x - mean
    var = jnp.mean(centered * centered, axis=-1, keepdims=True)
    x_ln = centered * lax.rsqrt(var + LN_EPS) * g_ref[...] + b_ref[...]
    # bf16 x bf16 on the MXU with f32 accumulation (output stays f32, matching
    # the PyTorch .float()).
    o_ref[...] = jnp.dot(x_ln.astype(wt_ref.dtype), wt_ref[...],
                         preferred_element_type=jnp.float32)


def prepare_token_embedding(token_embedding_weight, *, tn=1024):
    """One-time (per model) weight preprocessing.

    Returns (w_blocked, vocab_size) where w_blocked has shape
    (V_pad // tn, D, tn) in bf16: each (D, tn) block is contiguous in HBM so
    the kernel's weight DMA is a single contiguous transfer.
    Use tn=2048 (or 4096) for decode-dominant serving to halve grid-step count.
    """
    V, D = token_embedding_weight.shape
    tn = min(tn, _round_up(V, 128))          # lane-dense vocab tile
    V_pad = _round_up(V, tn)
    w = token_embedding_weight.astype(jnp.bfloat16)
    if V_pad != V:
        w = jnp.pad(w, ((0, V_pad - V), (0, 0)))
    w_blocked = jnp.transpose(w.reshape(V_pad // tn, tn, D), (0, 2, 1))
    return w_blocked, V


def logits_inference_firstly_post_process(x, w_blocked, ln_weight, ln_bias, *,
                                          vocab_size, tm=512):
    """x: (B, T, D); w_blocked: output of prepare_token_embedding.
    Returns (B, T, V) float32 logits."""
    B, T, D = x.shape
    NB, D_w, tn = w_blocked.shape
    assert D == D_w
    V = vocab_size
    V_pad = NB * tn

    M = B * T
    tm = min(tm, _round_up(M, 8))            # keep sublane (8) alignment
    M_pad = _round_up(M, tm)
    n_rows = M_pad // tm

    x2d = x.reshape(M, D).astype(jnp.float32)
    if M_pad != M:
        x2d = jnp.pad(x2d, ((0, M_pad - M), (0, 0)))

    gamma = ln_weight.reshape(1, D).astype(jnp.float32)
    beta = ln_bias.reshape(1, D).astype(jnp.float32)

    # Working-set-derived VMEM request: double-buffered x / W / out tiles plus
    # headroom for compiler-internal scratch; clamped under v7x's 64 MiB/TC.
    work_bytes = (2 * tm * D * 4          # x tiles (f32)
                  + 2 * D * tn * 2        # weight tiles (bf16)
                  + 2 * tm * tn * 4       # output tiles (f32)
                  + 4 * D * 4)            # gamma / beta
    vmem_limit = int(min(max(int(work_bytes * 1.5) + (2 << 20), 16 << 20),
                         60 << 20))

    # Vocab is the SLOW axis, rows the FAST axis: the (V, D) embedding (the
    # dominant HBM stream) is fetched exactly once; the small x tiles are the
    # ones re-fetched when multiple row tiles exist.
    grid = (NB, n_rows)

    out = pl.pallas_call(
        _logits_post_kernel,
        out_shape=jax.ShapeDtypeStruct((M_pad, V_pad), jnp.float32),
        grid_spec=pltpu.PrefetchScalarGridSpec(
            num_scalar_prefetch=0,
            grid=grid,
            in_specs=[
                pl.BlockSpec((tm, D), lambda j, i: (i, 0)),         # x rows
                pl.BlockSpec((None, D, tn), lambda j, i: (j, 0, 0)),  # W block
                pl.BlockSpec((1, D), lambda j, i: (0, 0)),           # gamma
                pl.BlockSpec((1, D), lambda j, i: (0, 0)),           # beta
            ],
            out_specs=pl.BlockSpec((tm, tn), lambda j, i: (i, j)),
        ),
        compiler_params=pltpu.CompilerParams(
            dimension_semantics=("parallel", "parallel"),
            vmem_limit_bytes=vmem_limit,
        ),
    )(x2d, w_blocked, gamma, beta)

    if M_pad != M or V_pad != V:
        out = out[:M, :V]
    return out.reshape(B, T, V)


def make_logits_inference_firstly_post_process(token_embedding_weight,
                                               ln_weight, ln_bias, *, tn=1024):
    """Mirrors the nn.Module: preprocess + cache weights once, call many times."""
    w_blocked, V = prepare_token_embedding(token_embedding_weight, tn=tn)

    def apply(x, *, tm=512):
        return logits_inference_firstly_post_process(
            x, w_blocked, ln_weight, ln_bias, vocab_size=V, tm=tm)

    return apply


def _reference(x, w, g, b):
    x = x.astype(jnp.float32)
    mean = jnp.mean(x, axis=-1, keepdims=True)
    var = jnp.mean((x - mean) ** 2, axis=-1, keepdims=True)
    x_ln = (x - mean) / jnp.sqrt(var + LN_EPS) * g + b
    return (x_ln @ w.astype(jnp.float32).T).astype(jnp.float32)


if __name__ == "__main__":
    # Small whisper-like shapes: batch=2, n_ctx=8, n_state=128, n_vocab=1024.
    # tn=512 -> 2 vocab tiles, tm=8 -> 2 row tiles: exercises the full 2D grid.
    B, T, D, V = 2, 8, 128, 1024

    key = jax.random.PRNGKey(0)
    kx, kw, kg, kb = jax.random.split(key, 4)

    x = jax.random.normal(kx, (B, T, D), dtype=jnp.float32)
    token_embedding_weight = jax.random.normal(kw, (V, D), dtype=jnp.float32) * 0.02
    ln_weight = 1.0 + 0.1 * jax.random.normal(kg, (D,), dtype=jnp.float32)
    ln_bias = 0.1 * jax.random.normal(kb, (D,), dtype=jnp.float32)

    # Weight preprocessing happens exactly once here (cached in the closure).
    post_process = make_logits_inference_firstly_post_process(
        token_embedding_weight, ln_weight, ln_bias, tn=512)

    logits = post_process(x, tm=8)
    logits = jax.block_until_ready(logits)

    ref = _reference(x, token_embedding_weight, ln_weight, ln_bias)
    assert logits.shape == (B, T, V) and logits.dtype == jnp.float32
    # bf16 MXU feed (f32 accumulate) slightly loosens agreement with the pure
    # f32 reference; values here are O(0.3) so 2e-2 is comfortable.
    assert jnp.allclose(logits, ref, atol=2e-2, rtol=2e-2)

    print("KERNEL_OK")
</pallas_src>

<mosaic_0001>
module attributes {stable_mosaic.version = 11 : i64} {
  func.func @_logits_post_kernel(%arg0: i32, %arg1: i32, %arg2: memref<8x128xf32, #tpu.memory_space<vmem>>, %arg3: memref<1x128x512xbf16, #tpu.memory_space<vmem>>, %arg4: memref<1x128xf32, #tpu.memory_space<vmem>>, %arg5: memref<1x128xf32, #tpu.memory_space<vmem>>, %arg6: memref<8x512xf32, #tpu.memory_space<vmem>>) attributes {dimension_semantics = [#tpu.dimension_semantics<parallel>, #tpu.dimension_semantics<parallel>], iteration_bounds = array<i64: 2, 2>, scalar_prefetch = 0 : i64, scratch_operands = 0 : i64, tpu.core_type = #tpu.core_type<tc>, window_params = [{transform_indices = @transform_0, window_bounds = array<i64: 8, 128>}, {transform_indices = @transform_1, window_bounds = array<i64: 1, 128, 512>}, {pipeline_mode = #tpu.pipeline_mode<synchronous>, transform_indices = @transform_2, window_bounds = array<i64: 1, 128>}, {pipeline_mode = #tpu.pipeline_mode<synchronous>, transform_indices = @transform_3, window_bounds = array<i64: 1, 128>}, {transform_indices = @transform_4, window_bounds = array<i64: 8, 512>}]} {
    %c0 = arith.constant 0 : index
    %c0_0 = arith.constant 0 : index
    %0 = vector.load %arg2[%c0, %c0_0] : memref<8x128xf32, #tpu.memory_space<vmem>>, vector<8x128xf32>
    %cst = arith.constant dense<0.000000e+00> : vector<8xf32>
    %1 = vector.multi_reduction <add>, %0, %cst [1] : vector<8x128xf32> to vector<8xf32>
    %2 = vector.shape_cast %1 : vector<8xf32> to vector<8x1xf32>
    %cst_1 = arith.constant 1.280000e+02 : f32
    %3 = vector.broadcast %cst_1 : f32 to vector<8x1xf32>
    %4 = arith.divf %2, %3 : vector<8x1xf32>
    %5 = vector.broadcast %4 : vector<8x1xf32> to vector<8x128xf32>
    %6 = arith.subf %0, %5 : vector<8x128xf32>
    %7 = arith.mulf %6, %6 : vector<8x128xf32>
    %cst_2 = arith.constant dense<0.000000e+00> : vector<8xf32>
    %8 = vector.multi_reduction <add>, %7, %cst_2 [1] : vector<8x128xf32> to vector<8xf32>
    %9 = vector.shape_cast %8 : vector<8xf32> to vector<8x1xf32>
    %cst_3 = arith.constant 1.280000e+02 : f32
    %10 = vector.broadcast %cst_3 : f32 to vector<8x1xf32>
    %11 = arith.divf %9, %10 : vector<8x1xf32>
    %cst_4 = arith.constant 9.99999974E-6 : f32
    %12 = vector.broadcast %cst_4 : f32 to vector<8x1xf32>
    %13 = arith.addf %11, %12 : vector<8x1xf32>
    %14 = math.rsqrt %13 : vector<8x1xf32>
    %15 = vector.broadcast %14 : vector<8x1xf32> to vector<8x128xf32>
    %16 = arith.mulf %6, %15 : vector<8x128xf32>
    %c0_5 = arith.constant 0 : index
    %c0_6 = arith.constant 0 : index
    %17 = vector.load %arg4[%c0_5, %c0_6] : memref<1x128xf32, #tpu.memory_space<vmem>>, vector<1x128xf32>
    %18 = vector.broadcast %17 : vector<1x128xf32> to vector<8x128xf32>
    %19 = arith.mulf %16, %18 : vector<8x128xf32>
    %c0_7 = arith.constant 0 : index
    %c0_8 = arith.constant 0 : index
    %20 = vector.load %arg5[%c0_7, %c0_8] : memref<1x128xf32, #tpu.memory_space<vmem>>, vector<1x128xf32>
    %21 = vector.broadcast %20 : vector<1x128xf32> to vector<8x128xf32>
    %22 = arith.addf %19, %21 : vector<8x128xf32>
    %23 = arith.truncf %22 : vector<8x128xf32> to vector<8x128xbf16>
    %c0_9 = arith.constant 0 : index
    %c0_10 = arith.constant 0 : index
    %c0_11 = arith.constant 0 : index
    %24 = vector.load %arg3[%c0_9, %c0_10, %c0_11] : memref<1x128x512xbf16, #tpu.memory_space<vmem>>, vector<1x128x512xbf16>
    %25 = vector.shape_cast %24 : vector<1x128x512xbf16> to vector<128x512xbf16>
    %cst_12 = arith.constant dense<0.000000e+00> : vector<8x512xf32>
    %26 = tpu.matmul %23, %25, %cst_12 {dimension_numbers = #tpu.dot_dimension_numbers<[1], [0], [0], [1], [0, 0, 1, 1], [], []>} : vector<8x128xbf16>, vector<128x512xbf16>, vector<8x512xf32> -> vector<8x512xf32>
    %c0_13 = arith.constant 0 : index
    %c0_14 = arith.constant 0 : index
    %27 = vector.load %arg6[%c0_13, %c0_14] : memref<8x512xf32, #tpu.memory_space<vmem>>, vector<8x512xf32>
    tpu.vector_store %arg6[%c0_13, %c0_14], %26 {strides = array<i32>} : memref<8x512xf32, #tpu.memory_space<vmem>>, vector<8x512xf32>,
    return
  }
  func.func @transform_0(%arg0: i32, %arg1: i32) -> (i32, i32) {
    %c0_i32 = arith.constant 0 : i32
    %c0_i32_0 = arith.constant 0 : i32
    return %arg1, %c0_i32 : i32, i32
  }
  func.func @transform_1(%arg0: i32, %arg1: i32) -> (i32, i32, i32) {
    %c0_i32 = arith.constant 0 : i32
    %c0_i32_0 = arith.constant 0 : i32
    %c0_i32_1 = arith.constant 0 : i32
    return %arg0, %c0_i32, %c0_i32_0 : i32, i32, i32
  }
  func.func @transform_2(%arg0: i32, %arg1: i32) -> (i32, i32) {
    %c0_i32 = arith.constant 0 : i32
    %c0_i32_0 = arith.constant 0 : i32
    %c0_i32_1 = arith.constant 0 : i32
    return %c0_i32, %c0_i32_0 : i32, i32
  }
  func.func @transform_3(%arg0: i32, %arg1: i32) -> (i32, i32) {
    %c0_i32 = arith.constant 0 : i32
    %c0_i32_0 = arith.constant 0 : i32
    %c0_i32_1 = arith.constant 0 : i32
    return %c0_i32, %c0_i32_0 : i32, i32
  }
  func.func @transform_4(%arg0: i32, %arg1: i32) -> (i32, i32) {
    %c0_i32 = arith.constant 0 : i32
    return %arg1, %arg0 : i32, i32
  }
}

</mosaic_0001>

<llo_original>
// kernel: tpu_custom_call.1
$region0: #{tpu_custom_call.1}
  #allocation0 [shape = 'u32[]', space=smem, size = 0x4, offset = 0x4, fixed_abs, tag = 'smem constant byte address 0x4 - core index']
  #allocation1 [shape = 'u32[72,128]{1,0:T(1,128)}', space=vmem, size = 0x9000, scoped, tag = 'internal scratch']
  %s0 = inlined_call_operand.hbm [shape: f32[16,128], index: 0, kind: input, shape index: {}]
  %s1 = inlined_call_operand.hbm [shape: bf16[2,128,512], index: 1, kind: input, shape index: {}]
  %s2 = inlined_call_operand.vmem [shape: f32[1,128], index: 2, kind: input, shape index: {}]
  %s3 = inlined_call_operand.vmem [shape: f32[1,128], index: 3, kind: input, shape index: {}]
  %s4 = inlined_call_operand.hbm [shape: f32[16,1024], index: 4, kind: output, shape index: {}]
  %s5 = sld [smem:[#allocation0]]
  $region57: #{tpu_custom_call.1} parent=0
    _
  %s7 = ssub.s32 1, %s5
  %s8 = scalar_select 0, %s7, %s5
  $region1: #{tpu_custom_call.1} parent=0
    #allocation2 [shape = 'u8[8192]{0}', space=vmem, size = 0x2000, scoped, tag = 'input window, operand 0']
    #allocation3 [shape = 's32[2]{0}', space=sflag, size = 0x8, scoped, tag = 'scoped memory for tpu_custom_call.1']
    #allocation4 [shape = 's32[2]{0}', space=sflag, size = 0x8, scoped, tag = 'scoped memory for tpu_custom_call.1']
    #allocation5 [shape = 'u8[262144]{0}', space=vmem, size = 0x40000, scoped, tag = 'input window, operand 1']
    #allocation6 [shape = 's32[2]{0}', space=sflag, size = 0x8, scoped, tag = 'scoped memory for tpu_custom_call.1']
    #allocation7 [shape = 'u8[32768]{0}', space=vmem, size = 0x8000, scoped, tag = 'output window, operand 0']
    %9 = vsyncpa [#allocation3], 0
    %s10 = scalar_lea.sflag [#allocation3], 1
    %11 = vsyncpa %s10, 0
    %12 = vsyncpa [#allocation6], 0
    %s13 = scalar_lea.sflag [#allocation6], 1
    %14 = vsyncpa %s13, 0
    %15 = vsyncpa [#allocation4], 0
    %s16 = scalar_lea.sflag [#allocation4], 1
    %17 = vsyncpa %s16, 0
    loop: start=0, step=1, limit=6
    $region2: #{tpu_custom_call.1} parent=1 // loop_pre_header
      _
    $region3: #{tpu_custom_call.1} parent=1 // loop_header
      %s19 = sphi 0, %s23
      %p20 = scmp.ge.s32.totalorder %s19, 6
      %s26 = sphi 0, %s38
      %s27 = sphi 0, %s34
      %s28 = sphi 0, %s26
      %s29 = sphi 0, %s27
      %s30 = sphi 0, %s28
      %s31 = sphi 0, %s29
      %s41 = sphi 0, %s43
      %s44 = sphi 0, %s41
      %s45 = sphi 0, %s44
      %s61 = sphi 0, %s45
      %s67 = sphi 0, %s69
      %s70 = sphi 0, %s67
      %s71 = sphi 0, %s70
      %s87 = sphi 0, %s71
      %s91 = sphi 0, %s91
      %s93 = sphi 0, %s91
      %s94 = sphi 0, %s93
      %s108 = sphi 0, %s94
      %s112 = sphi 0, %s112
      %s114 = sphi 0, %s112
      %s115 = sphi 0, %s114
      %s129 = sphi 0, %s115
      %s137 = sphi 0, %s139
      %s140 = sphi 0, %s137
      %s141 = sphi 0, %s140
      %s157 = sphi 0, %s141
    $region4: #{tpu_custom_call.1} parent=1 // loop_header_branch
      %22 = sbr.rel (%p20) target = $region8
    $region5: #{tpu_custom_call.1} parent=1 // loop_body
      %s24 = ssub.s32 %s19, 1
      %s25 = ssub.s32 %s19, 2
      %s32 = sadd.s32 1, %s27
      %p33 = scmp.ge.s32.totalorder %s32, 2
      %s34 = scalar_select %p33, 0, %s32
      %s35 = sadd.s32 1, %s26
      %s36 = scalar_select %p33, %s35, %s26
      %p37 = scmp.ge.s32.totalorder %s36, 2
      %s38 = scalar_select %p37, 0, %s36
      %s39 = ssub.s32 %s27, %s34
      %p40 = scmp.eq.s32.totalorder %s39, 0
      %s42 = sadd.s32 %s41, 1
      %s43 = scalar_select %p40, %s41, %s42
      %p46 = pneg %p40
      %p47 = scmp.eq.s32.totalorder %s19, 3
      %p48 = por %p46, %p47
      %p49 = scmp.ne.s32.totalorder %s41, %s44
      %p50 = scmp.eq.s32.totalorder %s19, 0
      %p51 = por %p49, %p50
      %p52 = scmp.ne.s32.totalorder %s41, %s44
      %p53 = scmp.eq.s32.totalorder %s24, 3
      %p54 = por %p52, %p53
      %p55 = scmp.ne.s32.totalorder %s44, %s45
      %p56 = scmp.eq.s32.totalorder %s24, 0
      %p57 = por %p55, %p56
      %p58 = scmp.ne.s32.totalorder %s44, %s45
      %p59 = scmp.eq.s32.totalorder %s25, 3
      %p60 = por %p58, %p59
      %p62 = scmp.ne.s32.totalorder %s45, %s61
      %p63 = scmp.eq.s32.totalorder %s25, 0
      %p64 = por %p62, %p63
      %s65 = ssub.s32 %s26, %s38
      %p66 = scmp.eq.s32.totalorder %s65, 0
      %s68 = sadd.s32 %s67, 1
      %s69 = scalar_select %p66, %s67, %s68
      %p72 = pneg %p66
      %p73 = scmp.eq.s32.totalorder %s19, 3
      %p74 = por %p72, %p73
      %p75 = scmp.ne.s32.totalorder %s67, %s70
      %p76 = scmp.eq.s32.totalorder %s19, 0
      %p77 = por %p75, %p76
      %p78 = scmp.ne.s32.totalorder %s67, %s70
      %p79 = scmp.eq.s32.totalorder %s24, 3
      %p80 = por %p78, %p79
      %p81 = scmp.ne.s32.totalorder %s70, %s71
      %p82 = scmp.eq.s32.totalorder %s24, 0
      %p83 = por %p81, %p82
      %p84 = scmp.ne.s32.totalorder %s70, %s71
      %p85 = scmp.eq.s32.totalorder %s25, 3
      %p86 = por %p84, %p85
      %p88 = scmp.ne.s32.totalorder %s71, %s87
      %p89 = scmp.eq.s32.totalorder %s25, 0
      %p90 = por %p88, %p89
      %s92 = sadd.s32 %s91, 1
      %p95 = scmp.eq.s32.totalorder %s19, 3
      %p96 = scmp.ne.s32.totalorder %s91, %s93
      %p97 = scmp.eq.s32.totalorder %s19, 0
      %p98 = por %p96, %p97
      %p99 = scmp.ne.s32.totalorder %s91, %s93
      %p100 = scmp.eq.s32.totalorder %s24, 3
      %p101 = por %p99, %p100
      %p102 = scmp.ne.s32.totalorder %s93, %s94
      %p103 = scmp.eq.s32.totalorder %s24, 0
      %p104 = por %p102, %p103
      %p105 = scmp.ne.s32.totalorder %s93, %s94
      %p106 = scmp.eq.s32.totalorder %s25, 3
      %p107 = por %p105, %p106
      %p109 = scmp.ne.s32.totalorder %s94, %s108
      %p110 = scmp.eq.s32.totalorder %s25, 0
      %p111 = por %p109, %p110
      %s113 = sadd.s32 %s112, 1
      %p116 = scmp.eq.s32.totalorder %s19, 3
      %p117 = scmp.ne.s32.totalorder %s112, %s114
      %p118 = scmp.eq.s32.totalorder %s19, 0
      %p119 = por %p117, %p118
      %p120 = scmp.ne.s32.totalorder %s112, %s114
      %p121 = scmp.eq.s32.totalorder %s24, 3
      %p122 = por %p120, %p121
      %p123 = scmp.ne.s32.totalorder %s114, %s115
      %p124 = scmp.eq.s32.totalorder %s24, 0
      %p125 = por %p123, %p124
      %p126 = scmp.ne.s32.totalorder %s114, %s115
      %p127 = scmp.eq.s32.totalorder %s25, 3
      %p128 = por %p126, %p127
      %p130 = scmp.ne.s32.totalorder %s115, %s129
      %p131 = scmp.eq.s32.totalorder %s25, 0
      %p132 = por %p130, %p131
      %s133 = ssub.s32 %s27, %s34
      %s134 = ssub.s32 %s26, %s38
      %s135 = sor.u32 %s133, %s134
      %p136 = scmp.eq.s32.totalorder %s135, 0
      %s138 = sadd.s32 %s137, 1
      %s139 = scalar_select %p136, %s137, %s138
      %p142 = pneg %p136
      %p143 = scmp.eq.s32.totalorder %s19, 3
      %p144 = por %p142, %p143
      %p145 = scmp.ne.s32.totalorder %s137, %s140
      %p146 = scmp.eq.s32.totalorder %s19, 0
      %p147 = por %p145, %p146
      %p148 = scmp.ne.s32.totalorder %s137, %s140
      %p149 = scmp.eq.s32.totalorder %s24, 3
      %p150 = por %p148, %p149
      %p151 = scmp.ne.s32.totalorder %s140, %s141
      %p152 = scmp.eq.s32.totalorder %s24, 0
      %p153 = por %p151, %p152
      %p154 = scmp.ne.s32.totalorder %s140, %s141
      %p155 = scmp.eq.s32.totalorder %s25, 3
      %p156 = por %p154, %p155
      %p158 = scmp.ne.s32.totalorder %s141, %s157
      %p159 = scmp.eq.s32.totalorder %s25, 0
      %p160 = por %p158, %p159
      %p161 = scmp.le.s32.totalorder 1, %s19
      %p162 = scmp.lt.s32.totalorder %s19, 5
      %p163 = pnand %p161, %p162
      %p164 = pneg %p163
      // Predicated region
      $region9: #{tpu_custom_call.1} parent=5 // pred_check
        _
      $region10: #{tpu_custom_call.1} parent=5 // pred_check_branch
        %166 = sbr.rel (%p163) target = $region12
      $region11: #{tpu_custom_call.1} parent=5 // pred_region
        %s167 = ssub.s32 %s19, 1
        // Predicated region
        $region13: #{tpu_custom_call.1} parent=11 // pred_check
          %p168 = pneg %p104
        $region14: #{tpu_custom_call.1} parent=11 // pred_check_branch
          %170 = sbr.rel (%p168) target = $region16
        $region15: #{tpu_custom_call.1} parent=11 // pred_region
          _
        $region16: #{tpu_custom_call.1} parent=11 // pred_fallthru
          _
        // Predicated region
        $region17: #{tpu_custom_call.1} parent=11 // pred_check
          %p171 = pneg %p125
        $region18: #{tpu_custom_call.1} parent=11 // pred_check_branch
          %173 = sbr.rel (%p171) target = $region20
        $region19: #{tpu_custom_call.1} parent=11 // pred_region
          _
        $region20: #{tpu_custom_call.1} parent=11 // pred_fallthru
          _
      $region12: #{tpu_custom_call.1} parent=5 // pred_fallthru
        _
      %p174 = scmp.lt.s32.totalorder %s19, 4
      // Predicated region
      $region21: #{tpu_custom_call.1} parent=5 // pred_check
        %p175 = pneg %p174
      $region22: #{tpu_custom_call.1} parent=5 // pred_check_branch
        %177 = sbr.rel (%p175) target = $region24
      $region23: #{tpu_custom_call.1} parent=5 // pred_region
        // Predicated region
        $region25: #{tpu_custom_call.1} parent=23 // pred_check
          %p178 = pneg %p51
        $region26: #{tpu_custom_call.1} parent=23 // pred_check_branch
          %180 = sbr.rel (%p178) target = $region28
        $region27: #{tpu_custom_call.1} parent=23 // pred_region
          %s181 = sand.u32 %s41, 1
          %s182 = scalar_lea.sflag [#allocation3], %s181
          %s183 = sand.u32 %s41, 1
          %s184 = smul.addr %s183, 8
          %s185 = scalar_lea.vmem [#allocation2], %s184
          %187 = vsyncadd %s182, 0
          %s188 = smul.addr %s27, 8
          %s189 = scalar_lea.hbm %s0, %s188
          %s191 = sshll.u32 %s189, 4
          %s192 = int_to_ptr.hbm [resolvable:$true] %s191
          %s193 = sshll.u32 %s185, 4
          %s194 = int_to_ptr.vmem [resolvable:$true] %s193
          %196 = dma.hbm_to_vmem [thread:$0]  %s192, 128, %s194, %s182
        $region28: #{tpu_custom_call.1} parent=23 // pred_fallthru
          _
        // Predicated region
        $region29: #{tpu_custom_call.1} parent=23 // pred_check
          %p197 = pneg %p77
        $region30: #{tpu_custom_call.1} parent=23 // pred_check_branch
          %199 = sbr.rel (%p197) target = $region32
        $region31: #{tpu_custom_call.1} parent=23 // pred_region
          %s200 = sand.u32 %s67, 1
          %s201 = scalar_lea.sflag [#allocation6], %s200
          %s202 = sand.u32 %s67, 1
          %s203 = smul.addr %s202, 256
          %s204 = scalar_lea.vmem [#allocation5], %s203
          %206 = vsyncadd %s201, 0
          %s207 = smul.addr %s26, 64
          %s208 = smul.addr %s207, 4
          %s209 = scalar_lea.hbm %s1, %s208
          %s210 = sshll.u32 %s209, 4
          %s211 = int_to_ptr.hbm [resolvable:$true] %s210
          %s212 = sshll.u32 %s204, 4
          %s213 = int_to_ptr.vmem [resolvable:$true] %s212
          %218 = dma.hbm_to_vmem [thread:$0]  %s211, 4096, %s213, %s201, 256, 256, 16
        $region32: #{tpu_custom_call.1} parent=23 // pred_fallthru
          _
      $region24: #{tpu_custom_call.1} parent=5 // pred_fallthru
        _
      %p219 = scmp.le.s32.totalorder 1, %s19
      %p220 = scmp.lt.s32.totalorder %s19, 5
      %p221 = pnand %p219, %p220
      %p222 = pneg %p221
      // Predicated region
      $region33: #{tpu_custom_call.1} parent=5 // pred_check
        _
      $region34: #{tpu_custom_call.1} parent=5 // pred_check_branch
        %224 = sbr.rel (%p221) target = $region36
      $region35: #{tpu_custom_call.1} parent=5 // pred_region
        %s225 = ssub.s32 %s19, 1
        %s226 = sand.u32 %s44, 1
        %s227 = scalar_lea.sflag [#allocation3], %s226
        %s228 = sand.u32 %s44, 1
        %s229 = smul.addr %s228, 8
        %s230 = scalar_lea.vmem [#allocation2], %s229
        // Predicated region
        $region37: #{tpu_custom_call.1} parent=35 // pred_check
          %p231 = pneg %p57
        $region38: #{tpu_custom_call.1} parent=35 // pred_check_branch
          %233 = sbr.rel (%p231) target = $region40
        $region39: #{tpu_custom_call.1} parent=35 // pred_region
          %235 = dma.done %s227, 128
        $region40: #{tpu_custom_call.1} parent=35 // pred_fallthru
          _
        %s236 = sand.u32 %s70, 1
        %s237 = scalar_lea.sflag [#allocation6], %s236
        %s238 = sand.u32 %s70, 1
        %s239 = smul.addr %s238, 256
        %s240 = scalar_lea.vmem [#allocation5], %s239
        // Predicated region
        $region41: #{tpu_custom_call.1} parent=35 // pred_check
          %p241 = pneg %p83
        $region42: #{tpu_custom_call.1} parent=35 // pred_check_branch
          %243 = sbr.rel (%p241) target = $region44
        $region43: #{tpu_custom_call.1} parent=35 // pred_region
          %245 = dma.done %s237, 4096
        $region44: #{tpu_custom_call.1} parent=35 // pred_fallthru
          _
        %s246 = sand.u32 %s44, 1
        %s247 = scalar_lea.sflag [#allocation3], %s246
        %s248 = sand.u32 %s44, 1
        %s249 = smul.addr %s248, 8
        %s250 = scalar_lea.vmem [#allocation2], %s249
        %p251 = pneg %p57
        %p252 = pneg %p54
        %s253 = sand.u32 %s70, 1
        %s254 = scalar_lea.sflag [#allocation6], %s253
        %s255 = sand.u32 %s70, 1
        %s256 = smul.addr %s255, 256
        %s257 = scalar_lea.vmem [#allocation5], %s256
        %p258 = pneg %p83
        %p259 = pneg %p80
        %p260 = pneg %p104
        %p261 = pneg %p101
        %p262 = pneg %p125
        %p263 = pneg %p122
        %p264 = pneg %p153
        %p265 = pneg %p150
        %s266 = sand.u32 %s140, 1
        %s267 = scalar_lea.sflag [#allocation4], %s266
        %s268 = sand.u32 %s140, 1
        %s269 = smul.addr %s268, 32
        %s270 = scalar_lea.vmem [#allocation7], %s269
        %s271 = smul.u32 4, %s28
        %v272 = vld [vmem:[%s230] sm:$0xff]
        %273 = vadd.xlane.f32.xlu0 %v272
        %v274 = vpop.xlane.xlu0 %273
        %v275 = vrcp.pop 128.0
        %v276 = vmul.f32 128.0, %v275
        %v277 = vsub.f32 1.0, %v276
        %v278 = vmul.f32 %v275, %v277
        %v279 = vadd.f32 %v275, %v278
        %vm280 = vweird.f32 %v275
        %v281 = vsel %vm280, %v275, %v279
        %v282 = vmul.f32 %v274, %v281
        %v283 = vsub.f32 %v272, %v282
        %v284 = vmul.f32 %v283, %v283
        %285 = vadd.xlane.f32.xlu0 %v284
        %v286 = vpop.xlane.xlu0 %285
        %v287 = vmul.f32 %v286, %v281
        %v288 = vadd.f32 %v287, 1e-05
        %v289 = vrsqrt.pop %v288
        %v290 = vmul.f32 %v289, %v288
        %v291 = vmul.f32 %v290, %v289
        %v292 = vmul.f32 0.5, %v291
        %v293 = vsub.f32 1.5, %v292
        %v294 = vmul.f32 %v289, %v293
        %vm295 = vweird.f32 %v288
        %vm296 = vweird.f32 %v289
        %vm297 = vmor %vm295, %vm296
        %v298 = vsel %vm297, %v289, %v294
        %v299 = vmul.f32 %v283, %v298
        %v300 = vld [vmem:[%s2] sm:$0x1]
        %v302 = vperm.slane %v300, 0
        %v304 = vmul.f32 %v299, %v302
        %v305 = vld [vmem:[%s3] sm:$0x1]
        %v307 = vperm.slane %v305, 0
        %v309 = vadd.f32 %v304, %v307
        %v310 = vpack.c.bf16 %v309, %v309
        %v311 = vld [vmem:[%s240] sm:$0xff]
        %v312 = vld [vmem:[%s240 + $0x8] sm:$0xff]
        %v313 = vld [vmem:[%s240 + $0x10] sm:$0xff]
        %v314 = vld [vmem:[%s240 + $0x18] sm:$0xff]
        %v315 = vld [vmem:[%s240 + $0x20] sm:$0xff]
        %v316 = vld [vmem:[%s240 + $0x28] sm:$0xff]
        %v317 = vld [vmem:[%s240 + $0x30] sm:$0xff]
        %v318 = vld [vmem:[%s240 + $0x38] sm:$0xff]
        %v319 = vld [vmem:[%s240 + $0x40] sm:$0xff]
        %v320 = vld [vmem:[%s240 + $0x48] sm:$0xff]
        %v321 = vld [vmem:[%s240 + $0x50] sm:$0xff]
        %v322 = vld [vmem:[%s240 + $0x58] sm:$0xff]
        %v323 = vld [vmem:[%s240 + $0x60] sm:$0xff]
        %v324 = vld [vmem:[%s240 + $0x68] sm:$0xff]
        %v325 = vld [vmem:[%s240 + $0x70] sm:$0xff]
        %v326 = vld [vmem:[%s240 + $0x78] sm:$0xff]
        %v327 = vld [vmem:[%s240 + $0x80] sm:$0xff]
        %v328 = vld [vmem:[%s240 + $0x88] sm:$0xff]
        %v329 = vld [vmem:[%s240 + $0x90] sm:$0xff]
        %v330 = vld [vmem:[%s240 + $0x98] sm:$0xff]
        %v331 = vld [vmem:[%s240 + $0xa0] sm:$0xff]
        %v332 = vld [vmem:[%s240 + $0xa8] sm:$0xff]
        %v333 = vld [vmem:[%s240 + $0xb0] sm:$0xff]
        %v334 = vld [vmem:[%s240 + $0xb8] sm:$0xff]
        %v335 = vld [vmem:[%s240 + $0xc0] sm:$0xff]
        %v336 = vld [vmem:[%s240 + $0xc8] sm:$0xff]
        %v337 = vld [vmem:[%s240 + $0xd0] sm:$0xff]
        %v338 = vld [vmem:[%s240 + $0xd8] sm:$0xff]
        %v339 = vld [vmem:[%s240 + $0xe0] sm:$0xff]
        %v340 = vld [vmem:[%s240 + $0xe8] sm:$0xff]
        %v341 = vld [vmem:[%s240 + $0xf0] sm:$0xff]
        %v342 = vld [vmem:[%s240 + $0xf8] sm:$0xff]
        %v375 = vunpack.c.l.b16 %v311
        %v376 = vunpack.c.h.b16 %v311
        %v377 = vunpack.c.l.b16 %v312
        %v378 = vunpack.c.h.b16 %v312
        %v379 = vunpack.c.l.b16 %v313
        %v380 = vunpack.c.h.b16 %v313
        %v381 = vunpack.c.l.b16 %v314
        %v382 = vunpack.c.h.b16 %v314
        %v383 = vunpack.c.l.b16 %v315
        %v384 = vunpack.c.h.b16 %v315
        %v385 = vunpack.c.l.b16 %v316
        %v386 = vunpack.c.h.b16 %v316
        %v387 = vunpack.c.l.b16 %v317
        %v388 = vunpack.c.h.b16 %v317
        %v389 = vunpack.c.l.b16 %v318
        %v390 = vunpack.c.h.b16 %v318
        %v391 = vunpack.c.l.b16 %v319
        %v392 = vunpack.c.h.b16 %v319
        %v393 = vunpack.c.l.b16 %v320
        %v394 = vunpack.c.h.b16 %v320
        %v395 = vunpack.c.l.b16 %v321
        %v396 = vunpack.c.h.b16 %v321
        %v397 = vunpack.c.l.b16 %v322
        %v398 = vunpack.c.h.b16 %v322
        %v399 = vunpack.c.l.b16 %v323
        %v400 = vunpack.c.h.b16 %v323
        %v401 = vunpack.c.l.b16 %v324
        %v402 = vunpack.c.h.b16 %v324
        %v403 = vunpack.c.l.b16 %v325
        %v404 = vunpack.c.h.b16 %v325
        %v405 = vunpack.c.l.b16 %v326
        %v406 = vunpack.c.h.b16 %v326
        %v407 = vunpack.c.l.b16 %v327
        %v408 = vunpack.c.h.b16 %v327
        %v409 = vunpack.c.l.b16 %v328
        %v410 = vunpack.c.h.b16 %v328
        %v411 = vunpack.c.l.b16 %v329
        %v412 = vunpack.c.h.b16 %v329
        %v413 = vunpack.c.l.b16 %v330
        %v414 = vunpack.c.h.b16 %v330
        %v415 = vunpack.c.l.b16 %v331
        %v416 = vunpack.c.h.b16 %v331
        %v417 = vunpack.c.l.b16 %v332
        %v418 = vunpack.c.h.b16 %v332
        %v419 = vunpack.c.l.b16 %v333
        %v420 = vunpack.c.h.b16 %v333
        %v421 = vunpack.c.l.b16 %v334
        %v422 = vunpack.c.h.b16 %v334
        %v423 = vunpack.c.l.b16 %v335
        %v424 = vunpack.c.h.b16 %v335
        %v425 = vunpack.c.l.b16 %v336
        %v426 = vunpack.c.h.b16 %v336
        %v427 = vunpack.c.l.b16 %v337
        %v428 = vunpack.c.h.b16 %v337
        %v429 = vunpack.c.l.b16 %v338
        %v430 = vunpack.c.h.b16 %v338
        %v431 = vunpack.c.l.b16 %v339
        %v432 = vunpack.c.h.b16 %v339
        %v433 = vunpack.c.l.b16 %v340
        %v434 = vunpack.c.h.b16 %v340
        %v435 = vunpack.c.l.b16 %v341
        %v436 = vunpack.c.h.b16 %v341
        %v437 = vunpack.c.l.b16 %v342
        %v438 = vunpack.c.h.b16 %v342
        %v439 = vpack.c.b16 %v379, %v375
        %v440 = vpack.c.b16 %v380, %v376
        %v441 = vpack.c.b16 %v381, %v377
        %v442 = vpack.c.b16 %v382, %v378
        %v443 = vpack.c.b16 %v387, %v383
        %v444 = vpack.c.b16 %v388, %v384
        %v445 = vpack.c.b16 %v389, %v385
        %v446 = vpack.c.b16 %v390, %v386
        %v447 = vpack.c.b16 %v395, %v391
        %v448 = vpack.c.b16 %v396, %v392
        %v449 = vpack.c.b16 %v397, %v393
        %v450 = vpack.c.b16 %v398, %v394
        %v451 = vpack.c.b16 %v403, %v399
        %v452 = vpack.c.b16 %v404, %v400
        %v453 = vpack.c.b16 %v405, %v401
        %v454 = vpack.c.b16 %v406, %v402
        %v455 = vpack.c.b16 %v411, %v407
        %v456 = vpack.c.b16 %v412, %v408
        %v457 = vpack.c.b16 %v413, %v409
        %v458 = vpack.c.b16 %v414, %v410
        %v459 = vpack.c.b16 %v419, %v415
        %v460 = vpack.c.b16 %v420, %v416
        %v461 = vpack.c.b16 %v421, %v417
        %v462 = vpack.c.b16 %v422, %v418
        %v463 = vpack.c.b16 %v427, %v423
        %v464 = vpack.c.b16 %v428, %v424
        %v465 = vpack.c.b16 %v429, %v425
        %v466 = vpack.c.b16 %v430, %v426
        %v467 = vpack.c.b16 %v435, %v431
        %v468 = vpack.c.b16 %v436, %v432
        %v469 = vpack.c.b16 %v437, %v433
        %v470 = vpack.c.b16 %v438, %v434
        %503 = vmatpush.bf16.msra.mxu0 %v467
        %504 = vmatpush.bf16.msra.mxu0 %v463
        %505 = vmatpush.bf16.msra.mxu0 %v459
        %506 = vmatpush.bf16.msra.mxu0 %v455
        %507 = vmatpush.bf16.msra.mxu0 %v451
        %508 = vmatpush.bf16.msra.mxu0 %v447
        %509 = vmatpush.bf16.msra.mxu0 %v443
        %510 = vmatpush.bf16.msra.mxu0 %v439
        %511 = vmatmul.bf16.gmra.mxu0 %v310
        %v512 = vpop.f32.mrf.mxu0
        %v513 = vadd.f32 0.0, %v512
        %v514 = vpop.f32.mrf.mxu0
        %515 = vdwg.mxu0
        %516 = vmatpush.bf16.msra.mxu0 %v468
        %517 = vmatpush.bf16.msra.mxu0 %v464
        %518 = vmatpush.bf16.msra.mxu0 %v460
        %519 = vmatpush.bf16.msra.mxu0 %v456
        %520 = vmatpush.bf16.msra.mxu0 %v452
        %521 = vmatpush.bf16.msra.mxu0 %v448
        %522 = vmatpush.bf16.msra.mxu0 %v444
        %523 = vmatpush.bf16.msra.mxu0 %v440
        %524 = vmatmul.bf16.gmra.mxu0 %v310
        %v525 = vpop.f32.mrf.mxu0
        %v526 = vadd.f32 0.0, %v525
        %v527 = vpop.f32.mrf.mxu0
        %528 = vdwg.mxu0
        %529 = vmatpush.bf16.msra.mxu0 %v469
        %530 = vmatpush.bf16.msra.mxu0 %v465
        %531 = vmatpush.bf16.msra.mxu0 %v461
        %532 = vmatpush.bf16.msra.mxu0 %v457
        %533 = vmatpush.bf16.msra.mxu0 %v453
        %534 = vmatpush.bf16.msra.mxu0 %v449
        %535 = vmatpush.bf16.msra.mxu0 %v445
        %536 = vmatpush.bf16.msra.mxu0 %v441
        %537 = vmatmul.bf16.gmra.mxu0 %v310
        %v538 = vpop.f32.mrf.mxu0
        %v539 = vadd.f32 0.0, %v538
        %v540 = vpop.f32.mrf.mxu0
        %541 = vdwg.mxu0
        %542 = vmatpush.bf16.msra.mxu0 %v470
        %543 = vmatpush.bf16.msra.mxu0 %v466
        %544 = vmatpush.bf16.msra.mxu0 %v462
        %545 = vmatpush.bf16.msra.mxu0 %v458
        %546 = vmatpush.bf16.msra.mxu0 %v454
        %547 = vmatpush.bf16.msra.mxu0 %v450
        %548 = vmatpush.bf16.msra.mxu0 %v446
        %549 = vmatpush.bf16.msra.mxu0 %v442
        %550 = vmatmul.bf16.gmra.mxu0 %v310
        %v551 = vpop.f32.mrf.mxu0
        %v552 = vadd.f32 0.0, %v551
        %v553 = vpop.f32.mrf.mxu0
        %554 = vdwg.mxu0
        %555 = vst [vmem:[%s270] sm:$0xff] %v513
        %556 = vst [vmem:[%s270 + $0x8] sm:$0xff] %v526
        %557 = vst [vmem:[%s270 + $0x10] sm:$0xff] %v539
        %558 = vst [vmem:[%s270 + $0x18] sm:$0xff] %v552
        %s559 = sand.u32 %s140, 1
        %s560 = scalar_lea.sflag [#allocation4], %s559
        %s561 = sand.u32 %s140, 1
        %s562 = smul.addr %s561, 32
        %s563 = scalar_lea.vmem [#allocation7], %s562
        // Predicated region
        $region45: #{tpu_custom_call.1} parent=35 // pred_check
          %p564 = pneg %p150
        $region46: #{tpu_custom_call.1} parent=35 // pred_check_branch
          %566 = sbr.rel (%p564) target = $region48
        $region47: #{tpu_custom_call.1} parent=35 // pred_region
          %s567 = smul.u32 4, %s28
          %569 = vsyncadd %s560, 0
          %s570 = smul.addr %s29, 8
          %s571 = sadd.s32 %s567, %s570
          %s572 = smul.addr %s571, 8
          %s573 = scalar_lea.hbm %s4, %s572
          %s575 = sshll.u32 %s563, 4
          %s576 = int_to_ptr.vmem [resolvable:$true] %s575
          %s577 = sshll.u32 %s573, 4
          %s578 = int_to_ptr.hbm [resolvable:$true] %s577
          %580 = dma.vmem_to_hbm [thread:$0]  %s576, 512, %s578, %s560
        $region48: #{tpu_custom_call.1} parent=35 // pred_fallthru
          _
      $region36: #{tpu_custom_call.1} parent=5 // pred_fallthru
        _
      %p581 = scmp.le.s32.totalorder 2, %s19
      // Predicated region
      $region49: #{tpu_custom_call.1} parent=5 // pred_check
        %p582 = pneg %p581
      $region50: #{tpu_custom_call.1} parent=5 // pred_check_branch
        %584 = sbr.rel (%p582) target = $region52
      $region51: #{tpu_custom_call.1} parent=5 // pred_region
        %s585 = ssub.s32 %s19, 2
        // Predicated region
        $region53: #{tpu_custom_call.1} parent=51 // pred_check
          %p586 = pneg %p156
        $region54: #{tpu_custom_call.1} parent=51 // pred_check_branch
          %588 = sbr.rel (%p586) target = $region56
        $region55: #{tpu_custom_call.1} parent=51 // pred_region
          %s589 = sand.u32 %s141, 1
          %s590 = scalar_lea.sflag [#allocation4], %s589
          %s591 = sand.u32 %s141, 1
          %s592 = smul.addr %s591, 32
          %s593 = scalar_lea.vmem [#allocation7], %s592
          %595 = dma.done %s590, 512
        $region56: #{tpu_custom_call.1} parent=51 // pred_fallthru
          _
      $region52: #{tpu_custom_call.1} parent=5 // pred_fallthru
        _
    $region6: #{tpu_custom_call.1} parent=1 // loop_footer
      %s23 = sadd.s32 1, %s19
    $region7: #{tpu_custom_call.1} parent=1 // loop_footer_branch
      %18 = sbr.rel target = $region3
    $region8: #{tpu_custom_call.1} parent=1 // loop_exit
      _
    %596 = vsyncpa [#allocation3], 1
    %s597 = scalar_lea.sflag [#allocation3], 1
    %598 = vsyncpa %s597, 1
    %599 = vsyncpa [#allocation6], 1
    %s600 = scalar_lea.sflag [#allocation6], 1
    %601 = vsyncpa %s600, 1
    %602 = vsyncpa [#allocation4], 1
    %s603 = scalar_lea.sflag [#allocation4], 1
    %604 = vsyncpa %s603, 1

</llo_original>
